<compile_context>
chip_gen: v7x
topology: tpu7x:2x2x1
jax: 0.10.0
libtpu: 0.0.40
codegen_flags: <defaults>
</compile_context>

<pallas_src>
import jax
import jax.numpy as jnp
from jax.experimental import pallas as pl
from jax.experimental.pallas import tpu as pltpu


def hann_window(n: int) -> jnp.ndarray:
    # torch.hann_window(n) default (periodic=True)
    k = jnp.arange(n, dtype=jnp.float32)
    return 0.5 * (1.0 - jnp.cos(2.0 * jnp.pi * k / n))


def _round_up(x: int, m: int) -> int:
    return ((x + m - 1) // m) * m


def _vmem_budget_bytes() -> int:
    """~80% of physical VMEM: ~102 MiB on 128 MiB parts (v5e/v6e), ~51 MiB on v7x (64 MiB)."""
    cap = None
    try:
        cap = int(pltpu.get_tpu_info().vmem_capacity_bytes)
    except Exception:
        cap = None
    if cap is None:
        try:
            kind = jax.devices()[0].device_kind.lower()
            cap = (64 << 20) if "v7" in kind else (128 << 20)
        except Exception:
            cap = 128 << 20
    return (cap * 4) // 5


def _interleave_cols(re, im, ft):
    """(K, F) x2 -> (K, 2F) laid out per FT-column-tile as [re_j | im_j]."""
    K, F = re.shape
    nj = F // ft
    return jnp.concatenate(
        [re.reshape(K, nj, ft), im.reshape(K, nj, ft)], axis=2).reshape(K, 2 * F)


def _interleave_rows(re, im, ft):
    """(F, W) x2 -> (2F, W) laid out per FT-row-tile as [re_j ; im_j]."""
    F, W = re.shape
    nj = F // ft
    return jnp.concatenate(
        [re.reshape(nj, ft, W), im.reshape(nj, ft, W)], axis=1).reshape(2 * F, W)


def _make_kernel(ft: int, single_fout_step: bool):
    def kernel(x_ref, xn_ref, b_ref, d_ref, out_ref):
        # One wide MXU pass: [Hre | Him] = x @ [Bre_j | Bim_j]
        h = jnp.dot(x_ref[...], b_ref[...], preferred_element_type=jnp.float32)
        xn = xn_ref[...]                          # per-frame noise STFT [Xre_j | Xim_j], f32
        hre, him = h[:, :ft], h[:, ft:]
        xre, xim = xn[:, :ft], xn[:, ft:]
        # complex product Y = X * H (VPU), repacked as [Yre | Yim] for a single K=2*FT matmul
        y = jnp.concatenate([xre * hre - xim * him, xre * him + xim * hre], axis=1)
        res = jnp.dot(y.astype(d_ref.dtype), d_ref[...], preferred_element_type=jnp.float32)
        if single_fout_step:
            out_ref[...] = res                    # constants resident, no reduction axis
        else:
            @pl.when(pl.program_id(2) == 0)
            def _():
                out_ref[...] = jnp.zeros_like(out_ref)
            out_ref[...] += res
    return kernel


def _frames_reference(x, xc, b_cat, d_cat, ft, w_pad):
    """Same math as the kernel, plain jnp (used for the use_pallas=False path)."""
    Cn, Tp, _ = x.shape
    nj = d_cat.shape[0] // (2 * ft)
    out = jnp.zeros((Cn, Tp, w_pad), jnp.float32)
    for j in range(nj):
        b = b_cat[:, 2 * ft * j:2 * ft * (j + 1)]
        d = d_cat[2 * ft * j:2 * ft * (j + 1), :]
        xn = xc[:, 2 * ft * j:2 * ft * (j + 1)]
        h = jnp.einsum("ctf,fg->ctg", x, b, preferred_element_type=jnp.float32)
        hre, him = h[..., :ft], h[..., ft:]
        xre, xim = xn[None, :, :ft], xn[None, :, ft:]
        y = jnp.concatenate([xre * hre - xim * him, xre * him + xim * hre], axis=-1)
        out = out + jnp.einsum("ctg,gw->ctw", y.astype(d.dtype), d,
                               preferred_element_type=jnp.float32)
    return out


def _frames_fft_reference(H_re, NF, window, inv_window, ir_length, window_length):
    """Independent FFT-based reference of the torch forward (per-frame, pre-overlap-add)."""
    N, W = ir_length, window_length
    h = jnp.fft.irfft(H_re.astype(jnp.complex64), n=N, axis=-1)          # (T, C, N)
    h = jnp.roll(h, N // 2, axis=-1) * window[None, None, :]
    h = jnp.pad(h, ((0, 0), (0, 0), (0, W - N)))
    Hf = jnp.fft.rfft(h, axis=-1)                                        # (T, C, Fout)
    X = jnp.fft.rfft(NF, axis=-1)[:, None, :]                            # (T, 1, Fout)
    Y = X * Hf
    return jnp.fft.irfft(Y, n=W, axis=-1) * inv_window[None, None, :]    # (T, C, W)


class FIRNoiseSynthPallas:
    """Pallas/TPU port of FIRNoiseSynth.forward."""

    def __init__(self, ir_length: int, window_length: int, hop_length: int,
                 matmul_dtype=jnp.bfloat16, max_row_tile: int = 256):
        assert ir_length % 2 == 0 and window_length % 2 == 0
        assert window_length >= ir_length
        self.ir_length = ir_length
        self.window_length = window_length
        self.hop_length = hop_length
        self.matmul_dtype = matmul_dtype
        self.max_row_tile = max_row_tile
        self.window = hann_window(ir_length)            # buffer 'window'
        self.inv_window = hann_window(window_length)    # buffer 'inv_window'

        N, W = ir_length, window_length
        Fin, Fout = N // 2 + 1, W // 2 + 1
        self.Fin, self.Fout = Fin, Fout
        self.Fin_pad = _round_up(Fin, 128)
        self.Fout_pad = _round_up(Fout, 128)
        self.W_pad = _round_up(W, 128)                   # lane-dense output stores
        self.vmem_budget = _vmem_budget_bytes()

        # A: irfft(real-only spectrum) -> roll(N//2) -> *hann(N) -> zero-pad to W
        k = jnp.arange(Fin, dtype=jnp.float32)[:, None]       # (Fin, 1)
        n = jnp.arange(N, dtype=jnp.float32)[None, :]         # (1, N)
        wk = jnp.where((k == 0) | (k == N // 2), 1.0, 2.0)    # hermitian weights
        A = (wk / N) * jnp.cos(2.0 * jnp.pi * k * (n - N // 2) / N) * self.window[None, :]
        A = jnp.pad(A, ((0, 0), (0, W - N)))                  # (Fin, W)

        # C: rfft analysis of a length-W real frame; fold A in:  H = x @ (A @ C)
        nn = jnp.arange(W, dtype=jnp.float32)[:, None]        # (W, 1)
        m = jnp.arange(Fout, dtype=jnp.float32)[None, :]      # (1, Fout)
        ang = 2.0 * jnp.pi * nn * m / W
        Bre = A @ jnp.cos(ang)                                # (Fin, Fout)
        Bim = A @ (-jnp.sin(ang))

        # D: one-sided irfft with the istft synthesis window folded into its columns
        wm = jnp.where((m == 0) | (m == W // 2), 1.0, 2.0).T  # (Fout, 1)
        ang2 = 2.0 * jnp.pi * m.T * nn.T / W                  # (Fout, W)
        Dre = (wm / W) * jnp.cos(ang2) * self.inv_window[None, :]
        Dim = -(wm / W) * jnp.sin(ang2) * self.inv_window[None, :]

        # Zero-pad to 128 multiples (padded rows/cols are exactly zero)
        pi, po, pw = self.Fin_pad - Fin, self.Fout_pad - Fout, self.W_pad - W
        Bre = jnp.pad(Bre, ((0, pi), (0, po)))
        Bim = jnp.pad(Bim, ((0, pi), (0, po)))
        Dre = jnp.pad(Dre, ((0, po), (0, pw)))
        Dim = jnp.pad(Dim, ((0, po), (0, pw)))

        # Fout sub-tile: full Fout_pad (constants resident, DMA'd once) whenever it fits VMEM.
        self.fout_tile = self._pick_fout_tile(max_row_tile)
        ft = self.fout_tile
        # Per-FT-tile [re | im] interleave: one (.., 2*FT) block per grid step feeds the fused
        # real/imag matmuls (halves matmul launches, doubles N / K per MXU pass).
        self.B_cat = _interleave_cols(Bre, Bim, ft).astype(matmul_dtype)   # (Fin_pad, 2*Fout_pad)
        self.D_cat = _interleave_rows(Dre, Dim, ft).astype(matmul_dtype)   # (2*Fout_pad, W_pad)

    # ------------------------------------------------------------------ sizing
    def _vmem_estimate(self, tm, ft):
        e = jnp.dtype(self.matmul_dtype).itemsize
        b = 2 * self.Fin_pad * (2 * ft) * e          # B_cat block (double buffered)
        b += 2 * (2 * ft) * self.W_pad * e           # D_cat block
        b += 2 * tm * self.Fin_pad * e               # H_re row block
        b += 2 * tm * (2 * ft) * 4                   # noise-STFT block (f32)
        b += 2 * tm * self.W_pad * 4                 # resident f32 output block
        b += 6 * tm * (2 * ft) * 4                   # live elementwise temporaries
        return b

    def _pick_fout_tile(self, tm):
        m = self.Fout_pad // 128
        for d in sorted((d for d in range(1, m + 1) if m % d == 0), reverse=True):
            ft = 128 * d
            if self._vmem_estimate(tm, ft) <= self.vmem_budget:
                return ft
        return 128

    # ------------------------------------------------------------------ helpers
    def _noise_frames(self, noise, T):
        W, hop = self.window_length, self.hop_length
        assert noise.shape == (hop * T - 1,)
        assert hop * T - 1 > W // 2, "reflect pad needs len(noise) > window_length // 2"
        # torch.stft defaults: center=True, pad_mode='reflect', window=None (rectangular)
        padded = jnp.pad(noise.astype(jnp.float32), (W // 2, W // 2), mode="reflect")
        idx = jnp.arange(T)[:, None] * hop + jnp.arange(W)[None, :]
        return padded[idx]                                    # (T, W)

    # ------------------------------------------------------------------ core
    def frames(self, H_re, noise, use_pallas=True):
        """Windowed istft frames (T, C, W) before overlap-add."""
        T, C, Fin = H_re.shape
        assert Fin == self.Fin
        W, Wp, ft = self.window_length, self.W_pad, self.fout_tile

        tm = min(self.max_row_tile, _round_up(T, 8))          # frames per row tile
        T_pad = _round_up(T, tm)

        # Filters, channel-major so each row tile stays inside one channel.
        # TODO(synk): pre-pad H_re upstream to (C, T_pad, Fin_pad) to avoid this per-call copy.
        x = jnp.transpose(H_re, (1, 0, 2)).astype(self.matmul_dtype)
        x = jnp.pad(x, ((0, 0), (0, T_pad - T), (0, self.Fin_pad - Fin)))

        # Noise STFT once per frame (channel-independent); the channel broadcast happens via the
        # grid (the noise block index ignores the channel axis), not via an HBM jnp.repeat.
        NF = self._noise_frames(noise, T)
        X = jnp.fft.rfft(NF, axis=-1)                                        # (T, Fout)
        pad = ((0, T_pad - T), (0, self.Fout_pad - self.Fout))
        Xre = jnp.pad(jnp.real(X).astype(jnp.float32), pad)
        Xim = jnp.pad(jnp.imag(X).astype(jnp.float32), pad)
        Xc = _interleave_cols(Xre, Xim, ft)                                  # (T_pad, 2*Fout_pad)

        if not use_pallas:
            out = _frames_reference(x, Xc, self.B_cat, self.D_cat, ft, Wp)
        else:
            n_i = T_pad // tm
            n_j = self.Fout_pad // ft
            out = pl.pallas_call(
                _make_kernel(ft, n_j == 1),
                out_shape=jax.ShapeDtypeStruct((C, T_pad, Wp), jnp.float32),
                grid_spec=pltpu.PrefetchScalarGridSpec(
                    num_scalar_prefetch=0,
                    grid=(n_i, C, n_j),
                    in_specs=[
                        pl.BlockSpec((None, tm, self.Fin_pad), lambda i, c, j: (c, i, 0)),      # H_re rows
                        pl.BlockSpec((tm, 2 * ft), lambda i, c, j: (i, j)),                     # noise STFT
                        pl.BlockSpec((self.Fin_pad, 2 * ft), lambda i, c, j: (0, j)),           # B_cat
                        pl.BlockSpec((2 * ft, Wp), lambda i, c, j: (j, 0)),                     # D_cat
                    ],
                    out_specs=pl.BlockSpec((None, tm, Wp), lambda i, c, j: (c, i, 0)),
                ),
                compiler_params=pltpu.CompilerParams(
                    dimension_semantics=("parallel", "parallel", "arbitrary"),
                    vmem_limit_bytes=int(self.vmem_budget),
                ),
            )(x, Xc, self.B_cat, self.D_cat)
        return jnp.transpose(out[:, :T, :W], (1, 0, 2))                      # (T, C, W)

    def __call__(self, H_re, noise, length=None, use_pallas=True):
        T, C, _ = H_re.shape
        W, hop = self.window_length, self.hop_length
        frames = self.frames(H_re, noise, use_pallas=use_pallas)     # already * inv_window

        # torch.istft: overlap-add of windowed frames, normalize by OLA(window^2),
        # center-trim n_fft//2 on each side.
        # TODO(synk): the overlap-add is a strided scatter-add kept as plain-XLA glue; for
        # production-sized T it could be folded into the kernel (banded scatter matrix or an
        # aliased-accumulate Pallas kernel) to avoid the extra HBM round-trip of the frames.
        idx = jnp.arange(T)[:, None] * hop + jnp.arange(W)[None, :]
        expected = W + hop * (T - 1)
        ola_idx = idx.reshape(-1)
        y = jnp.zeros((C, expected), jnp.float32).at[:, ola_idx].add(
            frames.transpose(1, 0, 2).reshape(C, -1))
        env = jnp.zeros((expected,), jnp.float32).at[ola_idx].add(
            jnp.tile(self.inv_window ** 2, T))
        start = W // 2
        end = start + length if length is not None else expected - W // 2
        # epsilon guard: torch.istft errors where the window envelope is ~0; here we avoid inf/nan
        y = y[:, start:end] / jnp.maximum(env[start:end], 1e-11)
        return y.T[: T * hop]                                        # (samples, C) == torch y.t()


if __name__ == "__main__":
    ir_length, window_length, hop_length = 32, 64, 16
    T, C = 8, 2      # T = number of filter frames, C = channels
    synth = FIRNoiseSynthPallas(ir_length, window_length, hop_length)

    key = jax.random.PRNGKey(0)
    k_h, k_n = jax.random.split(key)
    H_re = jax.random.normal(k_h, (T, C, ir_length // 2 + 1), dtype=jnp.float32)
    # TODO(synk): torch.rand's RNG stream is not bit-reproducible in JAX; uniform noise in
    # [-1, 1) is drawn with jax.random instead (same distribution), passed explicitly.
    noise = jax.random.uniform(k_n, (hop_length * T - 1,), dtype=jnp.float32) * 2.0 - 1.0

    out = jax.block_until_ready(synth(H_re, noise, use_pallas=True))
    ref = jax.block_until_ready(synth(H_re, noise, use_pallas=False))

    # torch returns (hop*(T-1), C): istft yields hop*(T-1) samples, then [:T*hop] is a no-op.
    assert out.shape == (hop_length * (T - 1), C), out.shape
    assert bool(jnp.all(jnp.isfinite(out)))
    # Kernel vs identical-math jnp path (same folded matrices / dtypes): tight match.
    assert bool(jnp.allclose(out, ref, rtol=1e-2, atol=1e-2)), float(jnp.max(jnp.abs(out - ref)))

    # Kernel frames vs an independent pure-FFT reference of the torch forward: validates the
    # folded (A@C, window-in-D) matrices; loose bound absorbs bf16 DFT coefficients.
    fr_kernel = jax.block_until_ready(synth.frames(H_re, noise, use_pallas=True))
    fr_fft = _frames_fft_reference(H_re, synth._noise_frames(noise, T),
                                   synth.window, synth.inv_window, ir_length, window_length)
    rel = float(jnp.max(jnp.abs(fr_kernel - fr_fft)) / (jnp.max(jnp.abs(fr_fft)) + 1e-6))
    assert rel < 0.1, rel

    print("KERNEL_OK")
</pallas_src>

<mosaic_0001>
module attributes {stable_mosaic.version = 11 : i64} {
  func.func @kernel(%arg0: i32, %arg1: i32, %arg2: i32, %arg3: memref<1x8x128xbf16, #tpu.memory_space<vmem>>, %arg4: memref<8x256xf32, #tpu.memory_space<vmem>>, %arg5: memref<128x256xbf16, #tpu.memory_space<vmem>>, %arg6: memref<256x128xbf16, #tpu.memory_space<vmem>>, %arg7: memref<1x8x128xf32, #tpu.memory_space<vmem>>) attributes {dimension_semantics = [#tpu.dimension_semantics<parallel>, #tpu.dimension_semantics<parallel>, #tpu.dimension_semantics<arbitrary>], iteration_bounds = array<i64: 1, 2, 1>, scalar_prefetch = 0 : i64, scratch_operands = 0 : i64, tpu.core_type = #tpu.core_type<tc>, window_params = [{transform_indices = @transform_0, window_bounds = array<i64: 1, 8, 128>}, {transform_indices = @transform_1, window_bounds = array<i64: 8, 256>}, {transform_indices = @transform_2, window_bounds = array<i64: 128, 256>}, {transform_indices = @transform_3, window_bounds = array<i64: 256, 128>}, {transform_indices = @transform_4, window_bounds = array<i64: 1, 8, 128>}]} {
    %c0 = arith.constant 0 : index
    %c0_0 = arith.constant 0 : index
    %c0_1 = arith.constant 0 : index
    %0 = vector.load %arg3[%c0, %c0_0, %c0_1] : memref<1x8x128xbf16, #tpu.memory_space<vmem>>, vector<1x8x128xbf16>
    %1 = vector.shape_cast %0 : vector<1x8x128xbf16> to vector<8x128xbf16>
    %c0_2 = arith.constant 0 : index
    %c0_3 = arith.constant 0 : index
    %2 = vector.load %arg5[%c0_2, %c0_3] : memref<128x256xbf16, #tpu.memory_space<vmem>>, vector<128x256xbf16>
    %cst = arith.constant dense<0.000000e+00> : vector<8x256xf32>
    %3 = tpu.matmul %1, %2, %cst {dimension_numbers = #tpu.dot_dimension_numbers<[1], [0], [0], [1], [0, 0, 1, 1], [], []>} : vector<8x128xbf16>, vector<128x256xbf16>, vector<8x256xf32> -> vector<8x256xf32>
    %c0_4 = arith.constant 0 : index
    %c0_5 = arith.constant 0 : index
    %4 = vector.load %arg4[%c0_4, %c0_5] : memref<8x256xf32, #tpu.memory_space<vmem>>, vector<8x256xf32>
    %5 = vector.extract_strided_slice %3 {offsets = [0, 0], sizes = [8, 128], strides = [1, 1]} : vector<8x256xf32> to vector<8x128xf32>
    %6 = vector.extract_strided_slice %3 {offsets = [0, 128], sizes = [8, 128], strides = [1, 1]} : vector<8x256xf32> to vector<8x128xf32>
    %7 = vector.extract_strided_slice %4 {offsets = [0, 0], sizes = [8, 128], strides = [1, 1]} : vector<8x256xf32> to vector<8x128xf32>
    %8 = vector.extract_strided_slice %4 {offsets = [0, 128], sizes = [8, 128], strides = [1, 1]} : vector<8x256xf32> to vector<8x128xf32>
    %9 = arith.mulf %7, %5 : vector<8x128xf32>
    %10 = arith.mulf %8, %6 : vector<8x128xf32>
    %11 = arith.subf %9, %10 : vector<8x128xf32>
    %12 = arith.mulf %7, %6 : vector<8x128xf32>
    %13 = arith.mulf %8, %5 : vector<8x128xf32>
    %14 = arith.addf %12, %13 : vector<8x128xf32>
    %15 = tpu.concatenate %11, %14 in 1 : vector<8x128xf32>, vector<8x128xf32> -> vector<8x256xf32>
    %16 = arith.truncf %15 : vector<8x256xf32> to vector<8x256xbf16>
    %c0_6 = arith.constant 0 : index
    %c0_7 = arith.constant 0 : index
    %17 = vector.load %arg6[%c0_6, %c0_7] : memref<256x128xbf16, #tpu.memory_space<vmem>>, vector<256x128xbf16>
    %cst_8 = arith.constant dense<0.000000e+00> : vector<8x128xf32>
    %18 = tpu.matmul %16, %17, %cst_8 {dimension_numbers = #tpu.dot_dimension_numbers<[1], [0], [0], [1], [0, 0, 1, 1], [], []>} : vector<8x256xbf16>, vector<256x128xbf16>, vector<8x128xf32> -> vector<8x128xf32>
    %c0_9 = arith.constant 0 : index
    %c0_10 = arith.constant 0 : index
    %c0_11 = arith.constant 0 : index
    %19 = vector.load %arg7[%c0_9, %c0_10, %c0_11] : memref<1x8x128xf32, #tpu.memory_space<vmem>>, vector<1x8x128xf32>
    %20 = vector.shape_cast %19 : vector<1x8x128xf32> to vector<8x128xf32>
    %21 = vector.shape_cast %18 : vector<8x128xf32> to vector<1x8x128xf32>
    tpu.vector_store %arg7[%c0_9, %c0_10, %c0_11], %21 {strides = array<i32>} : memref<1x8x128xf32, #tpu.memory_space<vmem>>, vector<1x8x128xf32>,
    return
  }
  func.func @transform_0(%arg0: i32, %arg1: i32, %arg2: i32) -> (i32, i32, i32) {
    %c0_i32 = arith.constant 0 : i32
    %c0_i32_0 = arith.constant 0 : i32
    return %arg1, %arg0, %c0_i32 : i32, i32, i32
  }
  func.func @transform_1(%arg0: i32, %arg1: i32, %arg2: i32) -> (i32, i32) {
    %c0_i32 = arith.constant 0 : i32
    return %arg0, %arg2 : i32, i32
  }
  func.func @transform_2(%arg0: i32, %arg1: i32, %arg2: i32) -> (i32, i32) {
    %c0_i32 = arith.constant 0 : i32
    %c0_i32_0 = arith.constant 0 : i32
    return %c0_i32, %arg2 : i32, i32
  }
  func.func @transform_3(%arg0: i32, %arg1: i32, %arg2: i32) -> (i32, i32) {
    %c0_i32 = arith.constant 0 : i32
    %c0_i32_0 = arith.constant 0 : i32
    return %arg2, %c0_i32 : i32, i32
  }
  func.func @transform_4(%arg0: i32, %arg1: i32, %arg2: i32) -> (i32, i32, i32) {
    %c0_i32 = arith.constant 0 : i32
    %c0_i32_0 = arith.constant 0 : i32
    return %arg1, %arg0, %c0_i32 : i32, i32, i32
  }
}

</mosaic_0001>

<llo_original>
// kernel: tpu_custom_call.1
$region0: #{tpu_custom_call.1}
  #allocation0 [shape = 'u32[]', space=smem, size = 0x4, offset = 0x4, fixed_abs, tag = 'smem constant byte address 0x4 - core index']
  #allocation1 [shape = 'u32[144,128]{1,0:T(1,128)}', space=vmem, size = 0x12000, scoped, tag = 'internal scratch']
  %s0 = inlined_call_operand.hbm [shape: bf16[2,8,128], index: 0, kind: input, shape index: {}]
  %s1 = inlined_call_operand.hbm [shape: f32[8,256], index: 1, kind: input, shape index: {}]
  %s2 = inlined_call_operand.hbm [shape: bf16[128,256], index: 2, kind: input, shape index: {}]
  %s3 = inlined_call_operand.hbm [shape: bf16[256,128], index: 3, kind: input, shape index: {}]
  %s4 = inlined_call_operand.hbm [shape: f32[2,8,128], index: 4, kind: output, shape index: {}]
  %s5 = sld [smem:[#allocation0]]
  $region65: #{tpu_custom_call.1} parent=0
    _
  %s7 = ssub.s32 1, %s5
  %s8 = scalar_select 0, %s7, %s5
  $region1: #{tpu_custom_call.1} parent=0
    #allocation2 [shape = 'u8[4096]{0}', space=vmem, size = 0x1000, scoped, tag = 'input window, operand 0']
    #allocation3 [shape = 's32[2]{0}', space=sflag, size = 0x8, scoped, tag = 'scoped memory for tpu_custom_call.1']
    #allocation4 [shape = 's32[2]{0}', space=sflag, size = 0x8, scoped, tag = 'scoped memory for tpu_custom_call.1']
    #allocation5 [shape = 'u8[8192]{0}', space=vmem, size = 0x2000, scoped, tag = 'input window, operand 1, single buffered']
    #allocation6 [shape = 's32[1]{0}', space=sflag, size = 0x4, scoped, tag = 'scoped memory for tpu_custom_call.1']
    #allocation7 [shape = 'u8[65536]{0}', space=vmem, size = 0x10000, scoped, tag = 'input window, operand 2, single buffered']
    #allocation8 [shape = 'u8[65536]{0}', space=vmem, size = 0x10000, scoped, tag = 'input window, operand 3, single buffered']
    #allocation9 [shape = 's32[1]{0}', space=sflag, size = 0x4, scoped, tag = 'scoped memory for tpu_custom_call.1']
    #allocation10 [shape = 'u8[8192]{0}', space=vmem, size = 0x2000, scoped, tag = 'output window, operand 0']
    %9 = vsyncpa [#allocation3], 0
    %s10 = scalar_lea.sflag [#allocation3], 1
    %11 = vsyncpa %s10, 0
    %12 = vsyncpa [#allocation6], 0
    %13 = vsyncpa [#allocation9], 0
    %14 = vsyncpa [#allocation4], 0
    %s15 = scalar_lea.sflag [#allocation4], 1
    %16 = vsyncpa %s15, 0
    loop: start=0, step=1, limit=4
    $region2: #{tpu_custom_call.1} parent=1 // loop_pre_header
      _
    $region3: #{tpu_custom_call.1} parent=1 // loop_header
      %s18 = sphi 0, %s22
      %p19 = scmp.ge.s32.totalorder %s18, 4
      %s25 = sphi 0, %s44
      %s26 = sphi 0, %s40
      %s27 = sphi 0, %s36
      %s28 = sphi 0, %s25
      %s29 = sphi 0, %s26
      %s30 = sphi 0, %s27
      %s31 = sphi 0, %s28
      %s32 = sphi 0, %s29
      %s33 = sphi 0, %s30
      %s49 = sphi 0, %s51
      %s52 = sphi 0, %s49
      %s53 = sphi 0, %s52
      %s69 = sphi 0, %s53
      %s77 = sphi 0, %s79
      %s80 = sphi 0, %s77
      %s81 = sphi 0, %s80
      %s97 = sphi 0, %s81
      %s103 = sphi 0, %s105
      %s106 = sphi 0, %s103
      %s107 = sphi 0, %s106
      %s123 = sphi 0, %s107
      %s129 = sphi 0, %s131
      %s132 = sphi 0, %s129
      %s133 = sphi 0, %s132
      %s149 = sphi 0, %s133
      %s157 = sphi 0, %s159
      %s160 = sphi 0, %s157
      %s161 = sphi 0, %s160
      %s177 = sphi 0, %s161
    $region4: #{tpu_custom_call.1} parent=1 // loop_header_branch
      %21 = sbr.rel (%p19) target = $region8
    $region5: #{tpu_custom_call.1} parent=1 // loop_body
      %s23 = ssub.s32 %s18, 1
      %s24 = ssub.s32 %s18, 2
      %s34 = sadd.s32 1, %s27
      %p35 = scmp.ge.s32.totalorder %s34, 1
      %s36 = scalar_select %p35, 0, %s34
      %s37 = sadd.s32 1, %s26
      %s38 = scalar_select %p35, %s37, %s26
      %p39 = scmp.ge.s32.totalorder %s38, 2
      %s40 = scalar_select %p39, 0, %s38
      %s41 = sadd.s32 1, %s25
      %s42 = scalar_select %p39, %s41, %s25
      %p43 = scmp.ge.s32.totalorder %s42, 1
      %s44 = scalar_select %p43, 0, %s42
      %s45 = ssub.s32 %s26, %s40
      %s46 = ssub.s32 %s25, %s44
      %s47 = sor.u32 %s45, %s46
      %p48 = scmp.eq.s32.totalorder %s47, 0
      %s50 = sadd.s32 %s49, 1
      %s51 = scalar_select %p48, %s49, %s50
      %p54 = pneg %p48
      %p55 = scmp.eq.s32.totalorder %s18, 1
      %p56 = por %p54, %p55
      %p57 = scmp.ne.s32.totalorder %s49, %s52
      %p58 = scmp.eq.s32.totalorder %s18, 0
      %p59 = por %p57, %p58
      %p60 = scmp.ne.s32.totalorder %s49, %s52
      %p61 = scmp.eq.s32.totalorder %s23, 1
      %p62 = por %p60, %p61
      %p63 = scmp.ne.s32.totalorder %s52, %s53
      %p64 = scmp.eq.s32.totalorder %s23, 0
      %p65 = por %p63, %p64
      %p66 = scmp.ne.s32.totalorder %s52, %s53
      %p67 = scmp.eq.s32.totalorder %s24, 1
      %p68 = por %p66, %p67
      %p70 = scmp.ne.s32.totalorder %s53, %s69
      %p71 = scmp.eq.s32.totalorder %s24, 0
      %p72 = por %p70, %p71
      %s73 = ssub.s32 %s25, %s44
      %s74 = ssub.s32 %s27, %s36
      %s75 = sor.u32 %s73, %s74
      %p76 = scmp.eq.s32.totalorder %s75, 0
      %s78 = sadd.s32 %s77, 1
      %s79 = scalar_select %p76, %s77, %s78
      %p82 = pneg %p76
      %p83 = scmp.eq.s32.totalorder %s18, 1
      %p84 = por %p82, %p83
      %p85 = scmp.ne.s32.totalorder %s77, %s80
      %p86 = scmp.eq.s32.totalorder %s18, 0
      %p87 = por %p85, %p86
      %p88 = scmp.ne.s32.totalorder %s77, %s80
      %p89 = scmp.eq.s32.totalorder %s23, 1
      %p90 = por %p88, %p89
      %p91 = scmp.ne.s32.totalorder %s80, %s81
      %p92 = scmp.eq.s32.totalorder %s23, 0
      %p93 = por %p91, %p92
      %p94 = scmp.ne.s32.totalorder %s80, %s81
      %p95 = scmp.eq.s32.totalorder %s24, 1
      %p96 = por %p94, %p95
      %p98 = scmp.ne.s32.totalorder %s81, %s97
      %p99 = scmp.eq.s32.totalorder %s24, 0
      %p100 = por %p98, %p99
      %s101 = ssub.s32 %s27, %s36
      %p102 = scmp.eq.s32.totalorder %s101, 0
      %s104 = sadd.s32 %s103, 1
      %s105 = scalar_select %p102, %s103, %s104
      %p108 = pneg %p102
      %p109 = scmp.eq.s32.totalorder %s18, 1
      %p110 = por %p108, %p109
      %p111 = scmp.ne.s32.totalorder %s103, %s106
      %p112 = scmp.eq.s32.totalorder %s18, 0
      %p113 = por %p111, %p112
      %p114 = scmp.ne.s32.totalorder %s103, %s106
      %p115 = scmp.eq.s32.totalorder %s23, 1
      %p116 = por %p114, %p115
      %p117 = scmp.ne.s32.totalorder %s106, %s107
      %p118 = scmp.eq.s32.totalorder %s23, 0
      %p119 = por %p117, %p118
      %p120 = scmp.ne.s32.totalorder %s106, %s107
      %p121 = scmp.eq.s32.totalorder %s24, 1
      %p122 = por %p120, %p121
      %p124 = scmp.ne.s32.totalorder %s107, %s123
      %p125 = scmp.eq.s32.totalorder %s24, 0
      %p126 = por %p124, %p125
      %s127 = ssub.s32 %s27, %s36
      %p128 = scmp.eq.s32.totalorder %s127, 0
      %s130 = sadd.s32 %s129, 1
      %s131 = scalar_select %p128, %s129, %s130
      %p134 = pneg %p128
      %p135 = scmp.eq.s32.totalorder %s18, 1
      %p136 = por %p134, %p135
      %p137 = scmp.ne.s32.totalorder %s129, %s132
      %p138 = scmp.eq.s32.totalorder %s18, 0
      %p139 = por %p137, %p138
      %p140 = scmp.ne.s32.totalorder %s129, %s132
      %p141 = scmp.eq.s32.totalorder %s23, 1
      %p142 = por %p140, %p141
      %p143 = scmp.ne.s32.totalorder %s132, %s133
      %p144 = scmp.eq.s32.totalorder %s23, 0
      %p145 = por %p143, %p144
      %p146 = scmp.ne.s32.totalorder %s132, %s133
      %p147 = scmp.eq.s32.totalorder %s24, 1
      %p148 = por %p146, %p147
      %p150 = scmp.ne.s32.totalorder %s133, %s149
      %p151 = scmp.eq.s32.totalorder %s24, 0
      %p152 = por %p150, %p151
      %s153 = ssub.s32 %s26, %s40
      %s154 = ssub.s32 %s25, %s44
      %s155 = sor.u32 %s153, %s154
      %p156 = scmp.eq.s32.totalorder %s155, 0
      %s158 = sadd.s32 %s157, 1
      %s159 = scalar_select %p156, %s157, %s158
      %p162 = pneg %p156
      %p163 = scmp.eq.s32.totalorder %s18, 1
      %p164 = por %p162, %p163
      %p165 = scmp.ne.s32.totalorder %s157, %s160
      %p166 = scmp.eq.s32.totalorder %s18, 0
      %p167 = por %p165, %p166
      %p168 = scmp.ne.s32.totalorder %s157, %s160
      %p169 = scmp.eq.s32.totalorder %s23, 1
      %p170 = por %p168, %p169
      %p171 = scmp.ne.s32.totalorder %s160, %s161
      %p172 = scmp.eq.s32.totalorder %s23, 0
      %p173 = por %p171, %p172
      %p174 = scmp.ne.s32.totalorder %s160, %s161
      %p175 = scmp.eq.s32.totalorder %s24, 1
      %p176 = por %p174, %p175
      %p178 = scmp.ne.s32.totalorder %s161, %s177
      %p179 = scmp.eq.s32.totalorder %s24, 0
      %p180 = por %p178, %p179
      %p181 = scmp.le.s32.totalorder 1, %s18
      %p182 = scmp.lt.s32.totalorder %s18, 3
      %p183 = pnand %p181, %p182
      %p184 = pneg %p183
      // Predicated region
      $region9: #{tpu_custom_call.1} parent=5 // pred_check
        _
      $region10: #{tpu_custom_call.1} parent=5 // pred_check_branch
        %186 = sbr.rel (%p183) target = $region12
      $region11: #{tpu_custom_call.1} parent=5 // pred_region
        %s187 = ssub.s32 %s18, 1
        // Predicated region
        $region13: #{tpu_custom_call.1} parent=11 // pred_check
          %p188 = pneg %p93
        $region14: #{tpu_custom_call.1} parent=11 // pred_check_branch
          %190 = sbr.rel (%p188) target = $region16
        $region15: #{tpu_custom_call.1} parent=11 // pred_region
          %s191 = smul.u32 2, %s30
          %s193 = ssub.s32 256, 256
          %194 = vsyncadd [#allocation6], %s193
          %s195 = smul.addr %s28, 2
          %s196 = sadd.s32 %s191, %s195
          %s197 = smul.addr %s196, 128
          %s198 = scalar_lea.hbm %s1, %s197
          %s200 = sshll.u32 [#allocation5], 4
          %s201 = int_to_ptr.vmem [resolvable:$true] %s200
          %203 = dma.hbm_to_vmem [thread:$0]  %s198, 256, %s201, [#allocation6]
        $region16: #{tpu_custom_call.1} parent=11 // pred_fallthru
          _
        // Predicated region
        $region17: #{tpu_custom_call.1} parent=11 // pred_check
          %p204 = pneg %p119
        $region18: #{tpu_custom_call.1} parent=11 // pred_check_branch
          %206 = sbr.rel (%p204) target = $region20
        $region19: #{tpu_custom_call.1} parent=11 // pred_region
          %s207 = smul.u32 2, %s30
          %s209 = ssub.s32 2048, 2048
          %210 = vsyncadd [#allocation6], %s209
          %s211 = smul.addr %s207, 64
          %s212 = scalar_lea.hbm %s2, %s211
          %s213 = sshll.u32 [#allocation7], 4
          %s214 = int_to_ptr.vmem [resolvable:$true] %s213
          %219 = dma.hbm_to_vmem [thread:$0]  %s212, 2048, %s214, [#allocation6], 128, 128, 8
        $region20: #{tpu_custom_call.1} parent=11 // pred_fallthru
          _
        // Predicated region
        $region21: #{tpu_custom_call.1} parent=11 // pred_check
          %p220 = pneg %p145
        $region22: #{tpu_custom_call.1} parent=11 // pred_check_branch
          %222 = sbr.rel (%p220) target = $region24
        $region23: #{tpu_custom_call.1} parent=11 // pred_region
          %s223 = smul.u32 32, %s30
          %s225 = ssub.s32 2048, 2048
          %226 = vsyncadd [#allocation9], %s225
          %s227 = smul.addr %s223, 64
          %s228 = scalar_lea.hbm %s3, %s227
          %s229 = sshll.u32 [#allocation8], 4
          %s230 = int_to_ptr.vmem [resolvable:$true] %s229
          %235 = dma.hbm_to_vmem [thread:$0]  %s228, 2048, %s230, [#allocation9], 64, 64, 4
        $region24: #{tpu_custom_call.1} parent=11 // pred_fallthru
          _
      $region12: #{tpu_custom_call.1} parent=5 // pred_fallthru
        _
      %p236 = scmp.lt.s32.totalorder %s18, 2
      // Predicated region
      $region25: #{tpu_custom_call.1} parent=5 // pred_check
        %p237 = pneg %p236
      $region26: #{tpu_custom_call.1} parent=5 // pred_check_branch
        %239 = sbr.rel (%p237) target = $region28
      $region27: #{tpu_custom_call.1} parent=5 // pred_region
        // Predicated region
        $region29: #{tpu_custom_call.1} parent=27 // pred_check
          %p240 = pneg %p59
        $region30: #{tpu_custom_call.1} parent=27 // pred_check_branch
          %242 = sbr.rel (%p240) target = $region32
        $region31: #{tpu_custom_call.1} parent=27 // pred_region
          %s243 = sand.u32 %s49, 1
          %s244 = scalar_lea.sflag [#allocation3], %s243
          %s245 = sand.u32 %s49, 1
          %s246 = smul.addr %s245, 4
          %s247 = scalar_lea.vmem [#allocation2], %s246
          %s249 = ssub.s32 64, 64
          %250 = vsyncadd %s244, %s249
          %s251 = sadd.s32 %s25, %s26
          %s252 = smul.addr %s251, 64
          %s253 = scalar_lea.hbm %s0, %s252
          %s255 = sshll.u32 %s247, 4
          %s256 = int_to_ptr.vmem [resolvable:$true] %s255
          %258 = dma.hbm_to_vmem [thread:$0]  %s253, 64, %s256, %s244
        $region32: #{tpu_custom_call.1} parent=27 // pred_fallthru
          _
      $region28: #{tpu_custom_call.1} parent=5 // pred_fallthru
        _
      %p259 = scmp.le.s32.totalorder 1, %s18
      %p260 = scmp.lt.s32.totalorder %s18, 3
      %p261 = pnand %p259, %p260
      %p262 = pneg %p261
      // Predicated region
      $region33: #{tpu_custom_call.1} parent=5 // pred_check
        _
      $region34: #{tpu_custom_call.1} parent=5 // pred_check_branch
        %264 = sbr.rel (%p261) target = $region36
      $region35: #{tpu_custom_call.1} parent=5 // pred_region
        %s265 = ssub.s32 %s18, 1
        %s266 = sand.u32 %s52, 1
        %s267 = scalar_lea.sflag [#allocation3], %s266
        %s268 = sand.u32 %s52, 1
        %s269 = smul.addr %s268, 4
        %s270 = scalar_lea.vmem [#allocation2], %s269
        // Predicated region
        $region37: #{tpu_custom_call.1} parent=35 // pred_check
          %p271 = pneg %p65
        $region38: #{tpu_custom_call.1} parent=35 // pred_check_branch
          %273 = sbr.rel (%p271) target = $region40
        $region39: #{tpu_custom_call.1} parent=35 // pred_region
          %274 = dma.done %s267, 64
        $region40: #{tpu_custom_call.1} parent=35 // pred_fallthru
          _
        // Predicated region
        $region41: #{tpu_custom_call.1} parent=35 // pred_check
          %p275 = pneg %p93
        $region42: #{tpu_custom_call.1} parent=35 // pred_check_branch
          %277 = sbr.rel (%p275) target = $region44
        $region43: #{tpu_custom_call.1} parent=35 // pred_region
          %278 = dma.done [#allocation6], 256
        $region44: #{tpu_custom_call.1} parent=35 // pred_fallthru
          _
        // Predicated region
        $region45: #{tpu_custom_call.1} parent=35 // pred_check
          %p279 = pneg %p119
        $region46: #{tpu_custom_call.1} parent=35 // pred_check_branch
          %281 = sbr.rel (%p279) target = $region48
        $region47: #{tpu_custom_call.1} parent=35 // pred_region
          %282 = dma.done [#allocation6], 2048
        $region48: #{tpu_custom_call.1} parent=35 // pred_fallthru
          _
        // Predicated region
        $region49: #{tpu_custom_call.1} parent=35 // pred_check
          %p283 = pneg %p145
        $region50: #{tpu_custom_call.1} parent=35 // pred_check_branch
          %285 = sbr.rel (%p283) target = $region52
        $region51: #{tpu_custom_call.1} parent=35 // pred_region
          %286 = dma.done [#allocation9], 2048
        $region52: #{tpu_custom_call.1} parent=35 // pred_fallthru
          _
        %s287 = sand.u32 %s52, 1
        %s288 = scalar_lea.sflag [#allocation3], %s287
        %s289 = sand.u32 %s52, 1
        %s290 = smul.addr %s289, 4
        %s291 = scalar_lea.vmem [#allocation2], %s290
        %p292 = pneg %p65
        %p293 = pneg %p62
        %p294 = pneg %p93
        %p295 = pneg %p90
        %p296 = pneg %p119
        %p297 = pneg %p116
        %p298 = pneg %p145
        %p299 = pneg %p142
        %p300 = pneg %p173
        %p301 = pneg %p170
        %s302 = sand.u32 %s160, 1
        %s303 = scalar_lea.sflag [#allocation4], %s302
        %s304 = sand.u32 %s160, 1
        %s305 = smul.addr %s304, 8
        %s306 = scalar_lea.vmem [#allocation10], %s305
        %s307 = smul.u32 2, %s30
        %s308 = smul.u32 2, %s30
        %s309 = smul.u32 32, %s30
        %v311 = vld [vmem:[%s270] sm:$0xf]
        %v312 = vld [vmem:[#allocation7] sm:$0xff]
        %v313 = vld [vmem:[#allocation7 + $0x8] sm:$0xff]
        %v314 = vld [vmem:[#allocation7 + $0x10] sm:$0xff]
        %v315 = vld [vmem:[#allocation7 + $0x18] sm:$0xff]
        %v316 = vld [vmem:[#allocation7 + $0x20] sm:$0xff]
        %v317 = vld [vmem:[#allocation7 + $0x28] sm:$0xff]
        %v318 = vld [vmem:[#allocation7 + $0x30] sm:$0xff]
        %v319 = vld [vmem:[#allocation7 + $0x38] sm:$0xff]
        %v320 = vld [vmem:[#allocation7 + $0x40] sm:$0xff]
        %v321 = vld [vmem:[#allocation7 + $0x48] sm:$0xff]
        %v322 = vld [vmem:[#allocation7 + $0x50] sm:$0xff]
        %v323 = vld [vmem:[#allocation7 + $0x58] sm:$0xff]
        %v324 = vld [vmem:[#allocation7 + $0x60] sm:$0xff]
        %v325 = vld [vmem:[#allocation7 + $0x68] sm:$0xff]
        %v326 = vld [vmem:[#allocation7 + $0x70] sm:$0xff]
        %v327 = vld [vmem:[#allocation7 + $0x78] sm:$0xff]
        %v344 = vunpack.c.l.b16 %v312
        %v345 = vunpack.c.h.b16 %v312
        %v346 = vunpack.c.l.b16 %v313
        %v347 = vunpack.c.h.b16 %v313
        %v348 = vunpack.c.l.b16 %v314
        %v349 = vunpack.c.h.b16 %v314
        %v350 = vunpack.c.l.b16 %v315
        %v351 = vunpack.c.h.b16 %v315
        %v352 = vunpack.c.l.b16 %v316
        %v353 = vunpack.c.h.b16 %v316
        %v354 = vunpack.c.l.b16 %v317
        %v355 = vunpack.c.h.b16 %v317
        %v356 = vunpack.c.l.b16 %v318
        %v357 = vunpack.c.h.b16 %v318
        %v358 = vunpack.c.l.b16 %v319
        %v359 = vunpack.c.h.b16 %v319
        %v360 = vunpack.c.l.b16 %v320
        %v361 = vunpack.c.h.b16 %v320
        %v362 = vunpack.c.l.b16 %v321
        %v363 = vunpack.c.h.b16 %v321
        %v364 = vunpack.c.l.b16 %v322
        %v365 = vunpack.c.h.b16 %v322
        %v366 = vunpack.c.l.b16 %v323
        %v367 = vunpack.c.h.b16 %v323
        %v368 = vunpack.c.l.b16 %v324
        %v369 = vunpack.c.h.b16 %v324
        %v370 = vunpack.c.l.b16 %v325
        %v371 = vunpack.c.h.b16 %v325
        %v372 = vunpack.c.l.b16 %v326
        %v373 = vunpack.c.h.b16 %v326
        %v374 = vunpack.c.l.b16 %v327
        %v375 = vunpack.c.h.b16 %v327
        %v376 = vpack.c.b16 %v346, %v344
        %v377 = vpack.c.b16 %v347, %v345
        %v378 = vpack.c.b16 %v350, %v348
        %v379 = vpack.c.b16 %v351, %v349
        %v380 = vpack.c.b16 %v354, %v352
        %v381 = vpack.c.b16 %v355, %v353
        %v382 = vpack.c.b16 %v358, %v356
        %v383 = vpack.c.b16 %v359, %v357
        %v384 = vpack.c.b16 %v362, %v360
        %v385 = vpack.c.b16 %v363, %v361
        %v386 = vpack.c.b16 %v366, %v364
        %v387 = vpack.c.b16 %v367, %v365
        %v388 = vpack.c.b16 %v370, %v368
        %v389 = vpack.c.b16 %v371, %v369
        %v390 = vpack.c.b16 %v374, %v372
        %v391 = vpack.c.b16 %v375, %v373
        %408 = vmatprep.subr.bf16.mxu0 %v377
        %409 = vmatpush1.bf16.msra.mxu0 %v376
        %410 = vmatprep.subr.bf16.mxu0 %v379
        %411 = vmatpush1.bf16.msra.mxu0 %v378
        %412 = vmatprep.subr.bf16.mxu0 %v381
        %413 = vmatpush1.bf16.msra.mxu0 %v380
        %414 = vmatprep.subr.bf16.mxu0 %v383
        %415 = vmatpush1.bf16.msra.mxu0 %v382
        %416 = vmatprep.subr.bf16.mxu0 %v385
        %417 = vmatpush1.bf16.msra.mxu0 %v384
        %418 = vmatprep.subr.bf16.mxu0 %v387
        %419 = vmatpush1.bf16.msra.mxu0 %v386
        %420 = vmatprep.subr.bf16.mxu0 %v389
        %421 = vmatpush1.bf16.msra.mxu0 %v388
        %422 = vmatprep.subr.bf16.mxu0 %v391
        %423 = vmatpush1.bf16.msra.mxu0 %v390
        %424 = vmatprep.subr.bf16.mxu0 0
        %425 = vmatpush1.bf16.msra.mxu0 0
        %426 = vmatprep.subr.bf16.mxu0 0
        %427 = vmatpush1.bf16.msra.mxu0 0
        %428 = vmatprep.subr.bf16.mxu0 0
        %429 = vmatpush1.bf16.msra.mxu0 0
        %430 = vmatprep.subr.bf16.mxu0 0
        %431 = vmatpush1.bf16.msra.mxu0 0
        %432 = vmatprep.subr.bf16.mxu0 0
        %433 = vmatpush1.bf16.msra.mxu0 0
        %434 = vmatprep.subr.bf16.mxu0 0
        %435 = vmatpush1.bf16.msra.mxu0 0
        %436 = vmatprep.subr.bf16.mxu0 0
        %437 = vmatpush1.bf16.msra.mxu0 0
        %438 = vmatprep.subr.bf16.mxu0 0
        %439 = vmatpush1.bf16.msra.mxu0 0
        %440 = vmatprep.mubr.bf16.mxu0 0
        %441 = vmatmul.mubr.bf16.gmra.mrb[0].mxu0 %v311
        %v442 = vpop.f32.mrb[0].mxu0
        %v443 = vadd.f32 0.0, %v442
        %v444 = vpop.f32.mrb[0].mxu0
        %v445 = vadd.f32 0.0, %v444
        %v446 = vpop.f32.mrb[0].mxu0
        %v447 = vpop.f32.mrb[0].mxu0
        %448 = vdwg.mxu0
        %v449 = vld [vmem:[#allocation5] sm:$0xff]
        %v450 = vld [vmem:[#allocation5 + $0x8] sm:$0xff]
        %v451 = vmul.f32 %v449, %v443
        %v452 = vmul.f32 %v450, %v445
        %v453 = vsub.f32 %v451, %v452
        %v454 = vmul.f32 %v449, %v445
        %v455 = vmul.f32 %v450, %v443
        %v456 = vadd.f32 %v454, %v455
        %v457 = vpack.c.bf16 %v453, %v453
        %v458 = vpack.c.bf16 %v456, %v456
        %v459 = vld [vmem:[#allocation8] sm:$0xf]
        %v460 = vld [vmem:[#allocation8 + $0x4] sm:$0xf]
        %v461 = vld [vmem:[#allocation8 + $0x8] sm:$0xf]
        %v462 = vld [vmem:[#allocation8 + $0xc] sm:$0xf]
        %v463 = vld [vmem:[#allocation8 + $0x10] sm:$0xf]
        %v464 = vld [vmem:[#allocation8 + $0x14] sm:$0xf]
        %v465 = vld [vmem:[#allocation8 + $0x18] sm:$0xf]
        %v466 = vld [vmem:[#allocation8 + $0x1c] sm:$0xf]
        %v467 = vld [vmem:[#allocation8 + $0x20] sm:$0xf]
        %v468 = vld [vmem:[#allocation8 + $0x24] sm:$0xf]
        %v469 = vld [vmem:[#allocation8 + $0x28] sm:$0xf]
        %v470 = vld [vmem:[#allocation8 + $0x2c] sm:$0xf]
        %v471 = vld [vmem:[#allocation8 + $0x30] sm:$0xf]
        %v472 = vld [vmem:[#allocation8 + $0x34] sm:$0xf]
        %v473 = vld [vmem:[#allocation8 + $0x38] sm:$0xf]
        %v474 = vld [vmem:[#allocation8 + $0x3c] sm:$0xf]
        %v475 = vld [vmem:[#allocation8 + $0x40] sm:$0xf]
        %v476 = vld [vmem:[#allocation8 + $0x44] sm:$0xf]
        %v477 = vld [vmem:[#allocation8 + $0x48] sm:$0xf]
        %v478 = vld [vmem:[#allocation8 + $0x4c] sm:$0xf]
        %v479 = vld [vmem:[#allocation8 + $0x50] sm:$0xf]
        %v480 = vld [vmem:[#allocation8 + $0x54] sm:$0xf]
        %v481 = vld [vmem:[#allocation8 + $0x58] sm:$0xf]
        %v482 = vld [vmem:[#allocation8 + $0x5c] sm:$0xf]
        %v483 = vld [vmem:[#allocation8 + $0x60] sm:$0xf]
        %v484 = vld [vmem:[#allocation8 + $0x64] sm:$0xf]
        %v485 = vld [vmem:[#allocation8 + $0x68] sm:$0xf]
        %v486 = vld [vmem:[#allocation8 + $0x6c] sm:$0xf]
        %v487 = vld [vmem:[#allocation8 + $0x70] sm:$0xf]
        %v488 = vld [vmem:[#allocation8 + $0x74] sm:$0xf]
        %v489 = vld [vmem:[#allocation8 + $0x78] sm:$0xf]
        %v490 = vld [vmem:[#allocation8 + $0x7c] sm:$0xf]
        %v523 = vunpack.c.l.b16 %v459
        %v524 = vunpack.c.l.b16 %v460
        %v525 = vunpack.c.l.b16 %v461
        %v526 = vunpack.c.l.b16 %v462
        %v527 = vunpack.c.l.b16 %v463
        %v528 = vunpack.c.l.b16 %v464
        %v529 = vunpack.c.l.b16 %v465
        %v530 = vunpack.c.l.b16 %v466
        %v531 = vunpack.c.l.b16 %v467
        %v532 = vunpack.c.l.b16 %v468
        %v533 = vunpack.c.l.b16 %v469
        %v534 = vunpack.c.l.b16 %v470
        %v535 = vunpack.c.l.b16 %v471
        %v536 = vunpack.c.l.b16 %v472
        %v537 = vunpack.c.l.b16 %v473
        %v538 = vunpack.c.l.b16 %v474
        %v539 = vunpack.c.l.b16 %v475
        %v540 = vunpack.c.l.b16 %v476
        %v541 = vunpack.c.l.b16 %v477
        %v542 = vunpack.c.l.b16 %v478
        %v543 = vunpack.c.l.b16 %v479
        %v544 = vunpack.c.l.b16 %v480
        %v545 = vunpack.c.l.b16 %v481
        %v546 = vunpack.c.l.b16 %v482
        %v547 = vunpack.c.l.b16 %v483
        %v548 = vunpack.c.l.b16 %v484
        %v549 = vunpack.c.l.b16 %v485
        %v550 = vunpack.c.l.b16 %v486
        %v551 = vunpack.c.l.b16 %v487
        %v552 = vunpack.c.l.b16 %v488
        %v553 = vunpack.c.l.b16 %v489
        %v554 = vunpack.c.l.b16 %v490
        %v555 = vpack.c.b16 %v524, %v523
        %v556 = vpack.c.b16 %v526, %v525
        %v557 = vpack.c.b16 %v528, %v527
        %v558 = vpack.c.b16 %v530, %v529
        %v559 = vpack.c.b16 %v532, %v531
        %v560 = vpack.c.b16 %v534, %v533
        %v561 = vpack.c.b16 %v536, %v535
        %v562 = vpack.c.b16 %v538, %v537
        %v563 = vpack.c.b16 %v540, %v539
        %v564 = vpack.c.b16 %v542, %v541
        %v565 = vpack.c.b16 %v544, %v543
        %v566 = vpack.c.b16 %v546, %v545
        %v567 = vpack.c.b16 %v548, %v547
        %v568 = vpack.c.b16 %v550, %v549
        %v569 = vpack.c.b16 %v552, %v551
        %v570 = vpack.c.b16 %v554, %v553
        %587 = vmatprep.subr.bf16.mxu0 0
        %588 = vmatpush1.bf16.msra.mxu0 %v555
        %589 = vmatprep.subr.bf16.mxu0 0
        %590 = vmatpush1.bf16.msra.mxu0 %v556
        %591 = vmatprep.subr.bf16.mxu0 0
        %592 = vmatpush1.bf16.msra.mxu0 %v557
        %593 = vmatprep.subr.bf16.mxu0 0
        %594 = vmatpush1.bf16.msra.mxu0 %v558
        %595 = vmatprep.subr.bf16.mxu0 0
        %596 = vmatpush1.bf16.msra.mxu0 %v559
        %597 = vmatprep.subr.bf16.mxu0 0
        %598 = vmatpush1.bf16.msra.mxu0 %v560
        %599 = vmatprep.subr.bf16.mxu0 0
        %600 = vmatpush1.bf16.msra.mxu0 %v561
        %601 = vmatprep.subr.bf16.mxu0 0
        %602 = vmatpush1.bf16.msra.mxu0 %v562
        %603 = vmatprep.subr.bf16.mxu0 0
        %604 = vmatpush1.bf16.msra.mxu0 %v563
        %605 = vmatprep.subr.bf16.mxu0 0
        %606 = vmatpush1.bf16.msra.mxu0 %v564
        %607 = vmatprep.subr.bf16.mxu0 0
        %608 = vmatpush1.bf16.msra.mxu0 %v565
        %609 = vmatprep.subr.bf16.mxu0 0
        %610 = vmatpush1.bf16.msra.mxu0 %v566
        %611 = vmatprep.subr.bf16.mxu0 0
        %612 = vmatpush1.bf16.msra.mxu0 %v567
        %613 = vmatprep.subr.bf16.mxu0 0
        %614 = vmatpush1.bf16.msra.mxu0 %v568
        %615 = vmatprep.subr.bf16.mxu0 0
        %616 = vmatpush1.bf16.msra.mxu0 %v569
        %617 = vmatprep.subr.bf16.mxu0 0
        %618 = vmatpush1.bf16.msra.mxu0 %v570
        %619 = vmatprep.mubr.bf16.mxu0 %v458
        %620 = vmatmul.mubr.bf16.gmra.mrb[0].mxu0 %v457
        %v621 = vpop.f32.mrb[0].mxu0
        %v622 = vadd.f32 0.0, %v621
        %v623 = vpop.f32.mrb[0].mxu0
        %v624 = vpop.f32.mrb[0].mxu0
        %v625 = vpop.f32.mrb[0].mxu0
        %626 = vdwg.mxu0
        %627 = vst [vmem:[%s306] sm:$0xff] %v622
        %s628 = sand.u32 %s160, 1
        %s629 = scalar_lea.sflag [#allocation4], %s628
        %s630 = sand.u32 %s160, 1
        %s631 = smul.addr %s630, 8
        %s632 = scalar_lea.vmem [#allocation10], %s631
        // Predicated region
        $region53: #{tpu_custom_call.1} parent=35 // pred_check
          %p633 = pneg %p170
        $region54: #{tpu_custom_call.1} parent=35 // pred_check_branch
          %635 = sbr.rel (%p633) target = $region56
        $region55: #{tpu_custom_call.1} parent=35 // pred_region
          %s637 = ssub.s32 128, 128
          %638 = vsyncadd %s629, %s637
          %s639 = sadd.s32 %s28, %s29
          %s640 = smul.addr %s639, 128
          %s641 = scalar_lea.hbm %s4, %s640
          %s643 = sshll.u32 %s632, 4
          %s644 = int_to_ptr.vmem [resolvable:$true] %s643
          %646 = dma.vmem_to_hbm [thread:$0]  %s644, 128, %s641, %s629
        $region56: #{tpu_custom_call.1} parent=35 // pred_fallthru
          _
      $region36: #{tpu_custom_call.1} parent=5 // pred_fallthru
        _
      %p647 = scmp.le.s32.totalorder 2, %s18
      // Predicated region
      $region57: #{tpu_custom_call.1} parent=5 // pred_check
        %p648 = pneg %p647
      $region58: #{tpu_custom_call.1} parent=5 // pred_check_branch
        %650 = sbr.rel (%p648) target = $region60
      $region59: #{tpu_custom_call.1} parent=5 // pred_region
        %s651 = ssub.s32 %s18, 2
        // Predicated region
        $region61: #{tpu_custom_call.1} parent=59 // pred_check
          %p652 = pneg %p176
        $region62: #{tpu_custom_call.1} parent=59 // pred_check_branch
          %654 = sbr.rel (%p652) target = $region64
        $region63: #{tpu_custom_call.1} parent=59 // pred_region
          %s655 = sand.u32 %s161, 1
          %s656 = scalar_lea.sflag [#allocation4], %s655
          %s657 = sand.u32 %s161, 1
          %s658 = smul.addr %s657, 8
          %s659 = scalar_lea.vmem [#allocation10], %s658
          %660 = dma.done %s656, 128
        $region64: #{tpu_custom_call.1} parent=59 // pred_fallthru
          _
      $region60: #{tpu_custom_call.1} parent=5 // pred_fallthru
        _
    $region6: #{tpu_custom_call.1} parent=1 // loop_footer
      %s22 = sadd.s32 1, %s18
    $region7: #{tpu_custom_call.1} parent=1 // loop_footer_branch
      %17 = sbr.rel target = $region3
    $region8: #{tpu_custom_call.1} parent=1 // loop_exit
      _
    %661 = vsyncpa [#allocation3], 1
    %s662 = scalar_lea.sflag [#allocation3], 1
    %663 = vsyncpa %s662, 1
    %664 = vsyncpa [#allocation6], 1
    %665 = vsyncpa [#allocation9], 1
    %666 = vsyncpa [#allocation4], 1
    %s667 = scalar_lea.sflag [#allocation4], 1
    %668 = vsyncpa %s667, 1

</llo_original>
